<compile_context>
chip_gen: v5e
topology: v5e:2x2
jax: 0.10.0
libtpu: 0.0.40
codegen_flags: <defaults>
</compile_context>

<pallas_src>
import functools

import jax
import jax.numpy as jnp
from jax.experimental import pallas as pl
from jax.experimental.pallas import tpu as pltpu


def _round_up(x, m):
    return ((x + m - 1) // m) * m


def _logreg_kernel(x_ref, w_ref, b_ref, o_ref):
    # (TB, F) @ (F, Lp) on the MXU, f32 accumulate; bias add on the VPU.
    o_ref[...] = (
        jnp.dot(x_ref[...], w_ref[...], preferred_element_type=jnp.float32)
        + b_ref[...]
    )


@functools.partial(jax.jit, static_argnames=("tb", "use_pallas"))
def logreg_forward(x, weight, bias, *, tb=256, use_pallas=True):
    """Forward pass of LogReg.

    x:      (B, F)   f32
    weight: (L, F+1) f32  (PyTorch nn.Linear layout, last column is the
                           weight that multiplies the appended ones column)
    bias:   (L,)     f32
    returns (B, L)   f32  == cat([x, ones]) @ weight.T + bias
    """
    B, F = x.shape
    L, Fp1 = weight.shape
    assert Fp1 == F + 1

    # Fold the ones column into an effective bias (algebraically identical).
    w_main = weight[:, :F]              # (L, F)
    b_eff = bias + weight[:, F]         # (L,)

    if not use_pallas:
        # Tiny-shape fallback: custom-call overhead would dominate.
        return x @ w_main.T + b_eff

    # ---- padding for TPU-friendly tiles --------------------------------
    # Batch tile: multiple of 8 (sublane), capped at `tb`.
    TB = min(int(tb), _round_up(B, 8))
    TB = _round_up(TB, 8)
    Bp = _round_up(B, TB)
    # Output lane dim padded to a multiple of 128 -> dense vector stores.
    Lp = _round_up(L, 128)

    x_p = x if Bp == B else jnp.pad(x, ((0, Bp - B), (0, 0)))
    w_t = w_main.T                                        # (F, L)
    w_p = w_t if Lp == L else jnp.pad(w_t, ((0, 0), (0, Lp - L)))   # (F, Lp)
    b2d = b_eff.reshape(1, L)
    b_p = b2d if Lp == L else jnp.pad(b2d, ((0, 0), (0, Lp - L)))   # (1, Lp)

    grid = (Bp // TB,)

    out_p = pl.pallas_call(
        _logreg_kernel,
        out_shape=jax.ShapeDtypeStruct((Bp, Lp), jnp.float32),
        grid_spec=pltpu.PrefetchScalarGridSpec(
            num_scalar_prefetch=0,
            grid=grid,
            in_specs=[
                pl.BlockSpec((TB, F), lambda i: (i, 0)),   # X: tiled over batch
                pl.BlockSpec((F, Lp), lambda i: (0, 0)),   # W: resident in VMEM
                pl.BlockSpec((1, Lp), lambda i: (0, 0)),   # bias: resident
            ],
            out_specs=pl.BlockSpec((TB, Lp), lambda i: (i, 0)),
        ),
        compiler_params=pltpu.CompilerParams(
            dimension_semantics=("parallel",),   # megacore split on v7x
        ),
    )(x_p, w_p, b_p)

    return out_p[:B, :L]


def _reference(x, weight, bias):
    B = x.shape[0]
    newX = jnp.concatenate([x, jnp.ones((B, 1), jnp.float32)], axis=1)
    return newX @ weight.T + bias


if __name__ == "__main__":
    # Shapes consistent with the module: num_feats=32, num_labels=8, batch=8.
    B, F, L = 8, 32, 8

    key = jax.random.PRNGKey(0)
    kx, kw, kb, kx2 = jax.random.split(key, 4)

    x = jax.random.normal(kx, (B, F), dtype=jnp.float32)

    # Deterministic nn.Linear-style init: U(-1/sqrt(fan_in), 1/sqrt(fan_in)).
    bound = 1.0 / jnp.sqrt(jnp.float32(F + 1))
    weight = jax.random.uniform(kw, (L, F + 1), jnp.float32, -bound, bound)
    bias = jax.random.uniform(kb, (L,), jnp.float32, -bound, bound)

    # Small case (forces the Pallas path so the kernel is exercised).
    out = logreg_forward(x, weight, bias, tb=256, use_pallas=True)
    out = jax.block_until_ready(out)
    ref = _reference(x, weight, bias)
    assert out.shape == (B, L)
    assert jnp.allclose(out, ref, atol=1e-5, rtol=1e-5)

    # Larger batch to exercise the multi-tile grid + padding path.
    B2 = 520  # not a multiple of the 256-row tile -> exercises batch padding
    x2 = jax.random.normal(kx2, (B2, F), dtype=jnp.float32)
    out2 = logreg_forward(x2, weight, bias, tb=256, use_pallas=True)
    out2 = jax.block_until_ready(out2)
    ref2 = _reference(x2, weight, bias)
    assert out2.shape == (B2, L)
    assert jnp.allclose(out2, ref2, atol=1e-5, rtol=1e-5)

    print("KERNEL_OK")
</pallas_src>

<mosaic_0001>
module attributes {stable_mosaic.version = 11 : i64} {
  func.func @_logreg_kernel(%arg0: i32, %arg1: memref<8x32xf32, #tpu.memory_space<vmem>>, %arg2: memref<32x128xf32, #tpu.memory_space<vmem>>, %arg3: memref<1x128xf32, #tpu.memory_space<vmem>>, %arg4: memref<8x128xf32, #tpu.memory_space<vmem>>) attributes {dimension_semantics = [#tpu.dimension_semantics<parallel>], iteration_bounds = array<i64: 1>, scalar_prefetch = 0 : i64, scratch_operands = 0 : i64, tpu.core_type = #tpu.core_type<tc>, window_params = [{transform_indices = @transform_0, window_bounds = array<i64: 8, 32>}, {pipeline_mode = #tpu.pipeline_mode<synchronous>, transform_indices = @transform_1, window_bounds = array<i64: 32, 128>}, {pipeline_mode = #tpu.pipeline_mode<synchronous>, transform_indices = @transform_2, window_bounds = array<i64: 1, 128>}, {transform_indices = @transform_3, window_bounds = array<i64: 8, 128>}]} {
    %c0 = arith.constant 0 : index
    %c0_0 = arith.constant 0 : index
    %0 = vector.load %arg1[%c0, %c0_0] : memref<8x32xf32, #tpu.memory_space<vmem>>, vector<8x32xf32>
    %c0_1 = arith.constant 0 : index
    %c0_2 = arith.constant 0 : index
    %1 = vector.load %arg2[%c0_1, %c0_2] : memref<32x128xf32, #tpu.memory_space<vmem>>, vector<32x128xf32>
    %cst = arith.constant dense<0.000000e+00> : vector<8x128xf32>
    %2 = tpu.matmul %0, %1, %cst {dimension_numbers = #tpu.dot_dimension_numbers<[1], [0], [0], [1], [0, 0, 1, 1], [], []>} : vector<8x32xf32>, vector<32x128xf32>, vector<8x128xf32> -> vector<8x128xf32>
    %c0_3 = arith.constant 0 : index
    %c0_4 = arith.constant 0 : index
    %3 = vector.load %arg3[%c0_3, %c0_4] : memref<1x128xf32, #tpu.memory_space<vmem>>, vector<1x128xf32>
    %4 = vector.broadcast %3 : vector<1x128xf32> to vector<8x128xf32>
    %5 = arith.addf %2, %4 : vector<8x128xf32>
    %c0_5 = arith.constant 0 : index
    %c0_6 = arith.constant 0 : index
    %6 = vector.load %arg4[%c0_5, %c0_6] : memref<8x128xf32, #tpu.memory_space<vmem>>, vector<8x128xf32>
    tpu.vector_store %arg4[%c0_5, %c0_6], %5 {strides = array<i32>} : memref<8x128xf32, #tpu.memory_space<vmem>>, vector<8x128xf32>,
    return
  }
  func.func @transform_0(%arg0: i32) -> (i32, i32) {
    %c0_i32 = arith.constant 0 : i32
    %c0_i32_0 = arith.constant 0 : i32
    return %arg0, %c0_i32 : i32, i32
  }
  func.func @transform_1(%arg0: i32) -> (i32, i32) {
    %c0_i32 = arith.constant 0 : i32
    %c0_i32_0 = arith.constant 0 : i32
    %c0_i32_1 = arith.constant 0 : i32
    return %c0_i32, %c0_i32_0 : i32, i32
  }
  func.func @transform_2(%arg0: i32) -> (i32, i32) {
    %c0_i32 = arith.constant 0 : i32
    %c0_i32_0 = arith.constant 0 : i32
    %c0_i32_1 = arith.constant 0 : i32
    return %c0_i32, %c0_i32_0 : i32, i32
  }
  func.func @transform_3(%arg0: i32) -> (i32, i32) {
    %c0_i32 = arith.constant 0 : i32
    %c0_i32_0 = arith.constant 0 : i32
    return %arg0, %c0_i32 : i32, i32
  }
}

</mosaic_0001>

<llo_original>
// kernel: logreg_forward.1
$region0: #{logreg_forward.1}
  #allocation0 [shape = 'u32[]', space=smem, size = 0x4, offset = 0x4, fixed_abs, tag = 'smem constant byte address 0x4 - core index']
  #allocation1 [shape = 'u32[72,128]{1,0:T(1,128)}', space=vmem, size = 0x9000, scoped, tag = 'internal scratch']
  %s0 = inlined_call_operand.vmem [shape: f32[8,32], index: 0, kind: input, shape index: {}]
  %s1 = inlined_call_operand.vmem [shape: f32[32,128], index: 1, kind: input, shape index: {}]
  %s2 = inlined_call_operand.vmem [shape: f32[1,128], index: 2, kind: input, shape index: {}]
  %s3 = inlined_call_operand.hbm [shape: f32[8,128], index: 3, kind: output, shape index: {}]
  %s4 = sld [smem:[#allocation0]]
  $region22: #{logreg_forward.1} parent=0
    _
  %s6 = ssub.s32 1, %s4
  %s7 = scalar_select 0, %s6, %s4
  $region1: #{logreg_forward.1} parent=0
    #allocation2 [shape = 'u8[4096]{0}', space=vmem, size = 0x1000, scoped, tag = 'output window, operand 0, single buffered']
    #allocation3 [shape = 's32[1]{0}', space=sflag, size = 0x4, scoped, tag = 'scoped memory for logreg_forward.1']
    %8 = vsyncpa [#allocation3], 0
    // Predicated region
    $region2: #{logreg_forward.1} parent=1 // pred_check
      _
    $region3: #{logreg_forward.1} parent=1 // pred_check_branch
      %10 = sbr.rel (0) target = $region5
    $region4: #{logreg_forward.1} parent=1 // pred_region
      _
    $region5: #{logreg_forward.1} parent=1 // pred_fallthru
      _
    // Predicated region
    $region6: #{logreg_forward.1} parent=1 // pred_check
      _
    $region7: #{logreg_forward.1} parent=1 // pred_check_branch
      %12 = sbr.rel (0) target = $region9
    $region8: #{logreg_forward.1} parent=1 // pred_region
      _
    $region9: #{logreg_forward.1} parent=1 // pred_fallthru
      _
    // Predicated region
    $region10: #{logreg_forward.1} parent=1 // pred_check
      _
    $region11: #{logreg_forward.1} parent=1 // pred_check_branch
      %14 = sbr.rel (0) target = $region13
    $region12: #{logreg_forward.1} parent=1 // pred_region
      _
    $region13: #{logreg_forward.1} parent=1 // pred_fallthru
      _
    %v15 = vld [vmem:[%s0] sm:$0xff]
    %v16 = vld [vmem:[%s1] sm:$0xff]
    %v17 = vld [vmem:[%s1 + $0x8] sm:$0xff]
    %v18 = vld [vmem:[%s1 + $0x10] sm:$0xff]
    %v19 = vld [vmem:[%s1 + $0x18] sm:$0xff]
    %v20 = vld [vmem:[%s2] sm:$0x1]
    %v22 = vperm.slane %v20, 0
    %vm24 = vcmask 261120
    %v26 = vsel %vm24, %v15, 0
    %28 = vmatpush.msra.mxu0 0.0
    %29 = vmatpush.msra.mxu0 0.0
    %30 = vmatpush.msra.mxu0 0.0
    %31 = vmatpush.msra.mxu0 0.0
    %32 = vmatpush.msra.mxu0 0.0
    %33 = vmatpush.msra.mxu0 0.0
    %34 = vmatpush.msra.mxu0 0.0
    %35 = vmatpush.msra.mxu0 0.0
    %36 = vmatpush.msra.mxu0 0.0
    %37 = vmatpush.msra.mxu0 0.0
    %38 = vmatpush.msra.mxu0 0.0
    %39 = vmatpush.msra.mxu0 0.0
    %40 = vmatpush.msra.mxu0 %v19
    %41 = vmatpush.msra.mxu0 %v18
    %42 = vmatpush.msra.mxu0 %v17
    %43 = vmatpush.msra.mxu0 %v16
    %44 = vmatmul.f32.gmra.mxu0 %v26
    %v45 = vpop.f32.mrf.mxu0
    %v46 = vadd.f32 %v22, %v45
    %47 = vdwg.mxu0
    %48 = vst [vmem:[#allocation2] sm:$0xff] %v46
    // Predicated region
    $region14: #{logreg_forward.1} parent=1 // pred_check
      _
    $region15: #{logreg_forward.1} parent=1 // pred_check_branch
      %50 = sbr.rel (0) target = $region17
    $region16: #{logreg_forward.1} parent=1 // pred_region
      %52 = vsyncadd [#allocation3], 0
      %s54 = sshll.u32 [#allocation2], 4
      %s55 = int_to_ptr.vmem [resolvable:$true] %s54
      %s56 = sshll.u32 %s3, 4
      %s57 = int_to_ptr.hbm [resolvable:$true] %s56
      %59 = dma.vmem_to_hbm [thread:$0]  %s55, 128, %s57, [#allocation3]
    $region17: #{logreg_forward.1} parent=1 // pred_fallthru
      _
    // Predicated region
    $region18: #{logreg_forward.1} parent=1 // pred_check
      _
    $region19: #{logreg_forward.1} parent=1 // pred_check_branch
      %61 = sbr.rel (0) target = $region21
    $region20: #{logreg_forward.1} parent=1 // pred_region
      %63 = dma.done [#allocation3], 128
    $region21: #{logreg_forward.1} parent=1 // pred_fallthru
      _
    %64 = vsyncpa [#allocation3], 1

</llo_original>
